<compile_context>
chip_gen: v7x
topology: tpu7x:2x2x1
jax: 0.10.0
libtpu: 0.0.40
codegen_flags: <defaults>
</compile_context>

<pallas_src>
import functools

import jax
import jax.numpy as jnp
from jax.experimental import pallas as pl
from jax.experimental.pallas import tpu as pltpu


def mlp_kernel(x_ref,          # (2, TB)        f32, transposed input tile
               w1_ref,         # (HP, 2)        f32
               bh_ref,         # (5, HP, 1)     f32  (biases of layers 1..5)
               wh_ref,         # (4, HP, HP)    bf16 (hidden weights 2..5)
               w6_ref,         # (OUTP, HP)     bf16
               b6_ref,         # (OUTP, 1)      f32
               o_ref):         # (OUTP, TB)     f32
    x = x_ref[...]             # (2, TB)
    w1 = w1_ref[...]           # (HP, 2)

    # First layer: K=2 contraction as two VPU rank-1 broadcast-FMAs (skip MXU).
    h = w1[:, 0:1] * x[0:1, :] + w1[:, 1:2] * x[1:2, :] + bh_ref[0]
    h = jnp.maximum(h, 0.0)

    # Hidden layers: bf16 (HP, HP) @ (HP, TB) MXU matmuls with f32 accumulation.
    for j in range(4):
        h = jnp.dot(wh_ref[j], h.astype(jnp.bfloat16),
                    preferred_element_type=jnp.float32) + bh_ref[j + 1]
        h = jnp.maximum(h, 0.0)

    # Output layer (row 0 of the (OUTP, HP) padded weight is the real Linear(H,1)).
    out = jnp.dot(w6_ref[...], h.astype(jnp.bfloat16),
                  preferred_element_type=jnp.float32) + b6_ref[...]
    o_ref[...] = out.astype(o_ref.dtype)


def _pad2(a, rows, cols):
    """Zero-pad a 2-D array up to (rows, cols), f32."""
    out = jnp.zeros((rows, cols), jnp.float32)
    return out.at[:a.shape[0], :a.shape[1]].set(a.astype(jnp.float32))


@functools.partial(jax.jit, static_argnames=("tb",))
def mlp_forward(x, params, *, tb=256):
    """x: (B, 2) float32. params: 6 (W, b) pairs, W=(out,in), b=(out,) (PyTorch layout)."""
    B = x.shape[0]
    H = params[0][0].shape[0]                 # hidden width
    HP = ((H + 7) // 8) * 8                   # sublane-aligned hidden width (32 for H=32)
    OUTP = 8                                  # pad 1-wide output to a full sublane group

    (w1, b1), (w2, b2), (w3, b3), (w4, b4), (w5, b5), (w6, b6) = params

    # --- packed, padded operands --------------------------------------------------
    w1p = _pad2(w1, HP, 2)                                            # f32, VPU path
    wh = jnp.stack([_pad2(w, HP, HP) for w in (w2, w3, w4, w5)])      # (4, HP, HP)
    wh = wh.astype(jnp.bfloat16)                                      # MXU operands in bf16
    w6p = _pad2(w6, OUTP, HP).astype(jnp.bfloat16)
    bh = jnp.stack([_pad2(b.reshape(-1, 1), HP, 1)
                    for b in (b1, b2, b3, b4, b5)])                   # (5, HP, 1) f32
    b6p = _pad2(b6.reshape(-1, 1), OUTP, 1)

    # Batch on lanes: (2, B_pad), B_pad a multiple of the tile size.
    B_pad = pl.cdiv(B, tb) * tb
    xT = jnp.pad(x.astype(jnp.float32).T, ((0, 0), (0, B_pad - B)))

    grid = (B_pad // tb,)   # keep >=2 (even) steps when possible: shards over v7x's 2 TCs
    in_specs = [
        pl.BlockSpec((2, tb), lambda i: (0, i)),        # x tile marches with the grid
        pl.BlockSpec(w1p.shape, lambda i: (0, 0)),      # params stay VMEM-resident
        pl.BlockSpec(bh.shape, lambda i: (0, 0, 0)),
        pl.BlockSpec(wh.shape, lambda i: (0, 0, 0)),
        pl.BlockSpec(w6p.shape, lambda i: (0, 0)),
        pl.BlockSpec(b6p.shape, lambda i: (0, 0)),
    ]
    out_specs = pl.BlockSpec((OUTP, tb), lambda i: (0, i))

    out_padded = pl.pallas_call(
        mlp_kernel,
        out_shape=jax.ShapeDtypeStruct((OUTP, B_pad), jnp.float32),
        grid=grid,
        in_specs=in_specs,
        out_specs=out_specs,
        compiler_params=pltpu.CompilerParams(
            dimension_semantics=("parallel",)),
    )(xT, w1p, bh, wh, w6p, b6p)

    # Row 0 holds the real Linear(H,1) output; undo transpose/padding.
    return out_padded[0, :B].reshape(B, 1)


def init_params(hidden, key):
    """PyTorch-style init: W=(out,in), b=(out,), uniform(-1/sqrt(fan_in), +1/sqrt(fan_in))."""
    dims = [2] + [hidden] * 5 + [1]
    params = []
    keys = jax.random.split(key, len(dims) - 1)
    for i in range(len(dims) - 1):
        fan_in, fan_out = dims[i], dims[i + 1]
        bound = 1.0 / float(jnp.sqrt(jnp.float32(fan_in)))
        wk, bk = jax.random.split(keys[i])
        w = jax.random.uniform(wk, (fan_out, fan_in), jnp.float32, -bound, bound)
        b = jax.random.uniform(bk, (fan_out,), jnp.float32, -bound, bound)
        params.append((w, b))
    return params


def reference_forward(x, params):
    h = x
    for i, (w, b) in enumerate(params):
        h = h @ w.T + b
        if i < len(params) - 1:
            h = jnp.maximum(h, 0.0)
    return h


if __name__ == "__main__":
    key = jax.random.PRNGKey(0)
    k_x, k_p = jax.random.split(key)

    hidden = 32
    batch = 512          # 2 grid steps at TB=256 (even grid -> both v7x TensorCores)
    x = jax.random.normal(k_x, (batch, 2), jnp.float32)
    params = init_params(hidden, k_p)

    out = mlp_forward(x, params, tb=256)
    out = jax.block_until_ready(out)

    ref = reference_forward(x, params)
    assert out.shape == (batch, 1), out.shape
    # bf16 MXU operands with f32 accumulation -> tolerance relaxed vs. pure f32.
    assert jnp.allclose(out, ref, atol=2e-2, rtol=2e-2), (
        float(jnp.max(jnp.abs(out - ref))))

    print("KERNEL_OK")
</pallas_src>

<mosaic_0001>
module attributes {stable_mosaic.version = 11 : i64} {
  func.func @mlp_kernel(%arg0: i32, %arg1: memref<2x256xf32, #tpu.memory_space<vmem>>, %arg2: memref<32x2xf32, #tpu.memory_space<vmem>>, %arg3: memref<5x32x1xf32, #tpu.memory_space<vmem>>, %arg4: memref<4x32x32xbf16, #tpu.memory_space<vmem>>, %arg5: memref<8x32xbf16, #tpu.memory_space<vmem>>, %arg6: memref<8x1xf32, #tpu.memory_space<vmem>>, %arg7: memref<8x256xf32, #tpu.memory_space<vmem>>) attributes {dimension_semantics = [#tpu.dimension_semantics<parallel>], iteration_bounds = array<i64: 2>, scalar_prefetch = 0 : i64, scratch_operands = 0 : i64, tpu.core_type = #tpu.core_type<tc>, window_params = [{transform_indices = @transform_0, window_bounds = array<i64: 2, 256>}, {pipeline_mode = #tpu.pipeline_mode<synchronous>, transform_indices = @transform_1, window_bounds = array<i64: 32, 2>}, {pipeline_mode = #tpu.pipeline_mode<synchronous>, transform_indices = @transform_2, window_bounds = array<i64: 5, 32, 1>}, {pipeline_mode = #tpu.pipeline_mode<synchronous>, transform_indices = @transform_3, window_bounds = array<i64: 4, 32, 32>}, {pipeline_mode = #tpu.pipeline_mode<synchronous>, transform_indices = @transform_4, window_bounds = array<i64: 8, 32>}, {pipeline_mode = #tpu.pipeline_mode<synchronous>, transform_indices = @transform_5, window_bounds = array<i64: 8, 1>}, {transform_indices = @transform_6, window_bounds = array<i64: 8, 256>}]} {
    %c0 = arith.constant 0 : index
    %c0_0 = arith.constant 0 : index
    %0 = vector.load %arg1[%c0, %c0_0] : memref<2x256xf32, #tpu.memory_space<vmem>>, vector<2x256xf32>
    %c0_1 = arith.constant 0 : index
    %c0_2 = arith.constant 0 : index
    %1 = vector.load %arg2[%c0_1, %c0_2] : memref<32x2xf32, #tpu.memory_space<vmem>>, vector<32x2xf32>
    %2 = vector.extract_strided_slice %1 {offsets = [0, 0], sizes = [32, 1], strides = [1, 1]} : vector<32x2xf32> to vector<32x1xf32>
    %3 = vector.extract_strided_slice %0 {offsets = [0, 0], sizes = [1, 256], strides = [1, 1]} : vector<2x256xf32> to vector<1x256xf32>
    %4 = vector.broadcast %2 : vector<32x1xf32> to vector<32x256xf32>
    %5 = vector.broadcast %3 : vector<1x256xf32> to vector<32x256xf32>
    %6 = arith.mulf %4, %5 : vector<32x256xf32>
    %7 = vector.extract_strided_slice %1 {offsets = [0, 1], sizes = [32, 1], strides = [1, 1]} : vector<32x2xf32> to vector<32x1xf32>
    %8 = vector.extract_strided_slice %0 {offsets = [1, 0], sizes = [1, 256], strides = [1, 1]} : vector<2x256xf32> to vector<1x256xf32>
    %9 = vector.broadcast %7 : vector<32x1xf32> to vector<32x256xf32>
    %10 = vector.broadcast %8 : vector<1x256xf32> to vector<32x256xf32>
    %11 = arith.mulf %9, %10 : vector<32x256xf32>
    %12 = arith.addf %6, %11 : vector<32x256xf32>
    %c0_3 = arith.constant 0 : index
    %c0_4 = arith.constant 0 : index
    %c0_5 = arith.constant 0 : index
    %13 = vector.load %arg3[%c0_3, %c0_4, %c0_5] : memref<5x32x1xf32, #tpu.memory_space<vmem>>, vector<1x32x1xf32>
    %14 = vector.shape_cast %13 : vector<1x32x1xf32> to vector<32x1xf32>
    %15 = vector.broadcast %14 : vector<32x1xf32> to vector<32x256xf32>
    %16 = arith.addf %12, %15 : vector<32x256xf32>
    %cst = arith.constant 0.000000e+00 : f32
    %17 = vector.broadcast %cst : f32 to vector<32x256xf32>
    %18 = arith.maximumf %16, %17 : vector<32x256xf32>
    %c0_6 = arith.constant 0 : index
    %c0_7 = arith.constant 0 : index
    %c0_8 = arith.constant 0 : index
    %19 = vector.load %arg4[%c0_6, %c0_7, %c0_8] : memref<4x32x32xbf16, #tpu.memory_space<vmem>>, vector<1x32x32xbf16>
    %20 = vector.shape_cast %19 : vector<1x32x32xbf16> to vector<32x32xbf16>
    %21 = arith.truncf %18 : vector<32x256xf32> to vector<32x256xbf16>
    %cst_9 = arith.constant dense<0.000000e+00> : vector<32x256xf32>
    %22 = tpu.matmul %20, %21, %cst_9 {dimension_numbers = #tpu.dot_dimension_numbers<[1], [0], [0], [1], [0, 0, 1, 1], [], []>} : vector<32x32xbf16>, vector<32x256xbf16>, vector<32x256xf32> -> vector<32x256xf32>
    %c1 = arith.constant 1 : index
    %c0_10 = arith.constant 0 : index
    %c0_11 = arith.constant 0 : index
    %23 = vector.load %arg3[%c1, %c0_10, %c0_11] : memref<5x32x1xf32, #tpu.memory_space<vmem>>, vector<1x32x1xf32>
    %24 = vector.shape_cast %23 : vector<1x32x1xf32> to vector<32x1xf32>
    %25 = vector.broadcast %24 : vector<32x1xf32> to vector<32x256xf32>
    %26 = arith.addf %22, %25 : vector<32x256xf32>
    %cst_12 = arith.constant 0.000000e+00 : f32
    %27 = vector.broadcast %cst_12 : f32 to vector<32x256xf32>
    %28 = arith.maximumf %26, %27 : vector<32x256xf32>
    %c1_13 = arith.constant 1 : index
    %c0_14 = arith.constant 0 : index
    %c0_15 = arith.constant 0 : index
    %29 = vector.load %arg4[%c1_13, %c0_14, %c0_15] : memref<4x32x32xbf16, #tpu.memory_space<vmem>>, vector<1x32x32xbf16>
    %30 = vector.shape_cast %29 : vector<1x32x32xbf16> to vector<32x32xbf16>
    %31 = arith.truncf %28 : vector<32x256xf32> to vector<32x256xbf16>
    %cst_16 = arith.constant dense<0.000000e+00> : vector<32x256xf32>
    %32 = tpu.matmul %30, %31, %cst_16 {dimension_numbers = #tpu.dot_dimension_numbers<[1], [0], [0], [1], [0, 0, 1, 1], [], []>} : vector<32x32xbf16>, vector<32x256xbf16>, vector<32x256xf32> -> vector<32x256xf32>
    %c2 = arith.constant 2 : index
    %c0_17 = arith.constant 0 : index
    %c0_18 = arith.constant 0 : index
    %33 = vector.load %arg3[%c2, %c0_17, %c0_18] : memref<5x32x1xf32, #tpu.memory_space<vmem>>, vector<1x32x1xf32>
    %34 = vector.shape_cast %33 : vector<1x32x1xf32> to vector<32x1xf32>
    %35 = vector.broadcast %34 : vector<32x1xf32> to vector<32x256xf32>
    %36 = arith.addf %32, %35 : vector<32x256xf32>
    %cst_19 = arith.constant 0.000000e+00 : f32
    %37 = vector.broadcast %cst_19 : f32 to vector<32x256xf32>
    %38 = arith.maximumf %36, %37 : vector<32x256xf32>
    %c2_20 = arith.constant 2 : index
    %c0_21 = arith.constant 0 : index
    %c0_22 = arith.constant 0 : index
    %39 = vector.load %arg4[%c2_20, %c0_21, %c0_22] : memref<4x32x32xbf16, #tpu.memory_space<vmem>>, vector<1x32x32xbf16>
    %40 = vector.shape_cast %39 : vector<1x32x32xbf16> to vector<32x32xbf16>
    %41 = arith.truncf %38 : vector<32x256xf32> to vector<32x256xbf16>
    %cst_23 = arith.constant dense<0.000000e+00> : vector<32x256xf32>
    %42 = tpu.matmul %40, %41, %cst_23 {dimension_numbers = #tpu.dot_dimension_numbers<[1], [0], [0], [1], [0, 0, 1, 1], [], []>} : vector<32x32xbf16>, vector<32x256xbf16>, vector<32x256xf32> -> vector<32x256xf32>
    %c3 = arith.constant 3 : index
    %c0_24 = arith.constant 0 : index
    %c0_25 = arith.constant 0 : index
    %43 = vector.load %arg3[%c3, %c0_24, %c0_25] : memref<5x32x1xf32, #tpu.memory_space<vmem>>, vector<1x32x1xf32>
    %44 = vector.shape_cast %43 : vector<1x32x1xf32> to vector<32x1xf32>
    %45 = vector.broadcast %44 : vector<32x1xf32> to vector<32x256xf32>
    %46 = arith.addf %42, %45 : vector<32x256xf32>
    %cst_26 = arith.constant 0.000000e+00 : f32
    %47 = vector.broadcast %cst_26 : f32 to vector<32x256xf32>
    %48 = arith.maximumf %46, %47 : vector<32x256xf32>
    %c3_27 = arith.constant 3 : index
    %c0_28 = arith.constant 0 : index
    %c0_29 = arith.constant 0 : index
    %49 = vector.load %arg4[%c3_27, %c0_28, %c0_29] : memref<4x32x32xbf16, #tpu.memory_space<vmem>>, vector<1x32x32xbf16>
    %50 = vector.shape_cast %49 : vector<1x32x32xbf16> to vector<32x32xbf16>
    %51 = arith.truncf %48 : vector<32x256xf32> to vector<32x256xbf16>
    %cst_30 = arith.constant dense<0.000000e+00> : vector<32x256xf32>
    %52 = tpu.matmul %50, %51, %cst_30 {dimension_numbers = #tpu.dot_dimension_numbers<[1], [0], [0], [1], [0, 0, 1, 1], [], []>} : vector<32x32xbf16>, vector<32x256xbf16>, vector<32x256xf32> -> vector<32x256xf32>
    %c4 = arith.constant 4 : index
    %c0_31 = arith.constant 0 : index
    %c0_32 = arith.constant 0 : index
    %53 = vector.load %arg3[%c4, %c0_31, %c0_32] : memref<5x32x1xf32, #tpu.memory_space<vmem>>, vector<1x32x1xf32>
    %54 = vector.shape_cast %53 : vector<1x32x1xf32> to vector<32x1xf32>
    %55 = vector.broadcast %54 : vector<32x1xf32> to vector<32x256xf32>
    %56 = arith.addf %52, %55 : vector<32x256xf32>
    %cst_33 = arith.constant 0.000000e+00 : f32
    %57 = vector.broadcast %cst_33 : f32 to vector<32x256xf32>
    %58 = arith.maximumf %56, %57 : vector<32x256xf32>
    %c0_34 = arith.constant 0 : index
    %c0_35 = arith.constant 0 : index
    %59 = vector.load %arg5[%c0_34, %c0_35] : memref<8x32xbf16, #tpu.memory_space<vmem>>, vector<8x32xbf16>
    %60 = arith.truncf %58 : vector<32x256xf32> to vector<32x256xbf16>
    %cst_36 = arith.constant dense<0.000000e+00> : vector<8x256xf32>
    %61 = tpu.matmul %59, %60, %cst_36 {dimension_numbers = #tpu.dot_dimension_numbers<[1], [0], [0], [1], [0, 0, 1, 1], [], []>} : vector<8x32xbf16>, vector<32x256xbf16>, vector<8x256xf32> -> vector<8x256xf32>
    %c0_37 = arith.constant 0 : index
    %c0_38 = arith.constant 0 : index
    %62 = vector.load %arg6[%c0_37, %c0_38] : memref<8x1xf32, #tpu.memory_space<vmem>>, vector<8x1xf32>
    %63 = vector.broadcast %62 : vector<8x1xf32> to vector<8x256xf32>
    %64 = arith.addf %61, %63 : vector<8x256xf32>
    %c0_39 = arith.constant 0 : index
    %c0_40 = arith.constant 0 : index
    %65 = vector.load %arg7[%c0_39, %c0_40] : memref<8x256xf32, #tpu.memory_space<vmem>>, vector<8x256xf32>
    tpu.vector_store %arg7[%c0_39, %c0_40], %64 {strides = array<i32>} : memref<8x256xf32, #tpu.memory_space<vmem>>, vector<8x256xf32>,
    return
  }
  func.func @transform_0(%arg0: i32) -> (i32, i32) {
    %c0_i32 = arith.constant 0 : i32
    %c0_i32_0 = arith.constant 0 : i32
    return %c0_i32, %arg0 : i32, i32
  }
  func.func @transform_1(%arg0: i32) -> (i32, i32) {
    %c0_i32 = arith.constant 0 : i32
    %c0_i32_0 = arith.constant 0 : i32
    %c0_i32_1 = arith.constant 0 : i32
    return %c0_i32, %c0_i32_0 : i32, i32
  }
  func.func @transform_2(%arg0: i32) -> (i32, i32, i32) {
    %c0_i32 = arith.constant 0 : i32
    %c0_i32_0 = arith.constant 0 : i32
    %c0_i32_1 = arith.constant 0 : i32
    %c0_i32_2 = arith.constant 0 : i32
    return %c0_i32, %c0_i32_0, %c0_i32_1 : i32, i32, i32
  }
  func.func @transform_3(%arg0: i32) -> (i32, i32, i32) {
    %c0_i32 = arith.constant 0 : i32
    %c0_i32_0 = arith.constant 0 : i32
    %c0_i32_1 = arith.constant 0 : i32
    %c0_i32_2 = arith.constant 0 : i32
    return %c0_i32, %c0_i32_0, %c0_i32_1 : i32, i32, i32
  }
  func.func @transform_4(%arg0: i32) -> (i32, i32) {
    %c0_i32 = arith.constant 0 : i32
    %c0_i32_0 = arith.constant 0 : i32
    %c0_i32_1 = arith.constant 0 : i32
    return %c0_i32, %c0_i32_0 : i32, i32
  }
  func.func @transform_5(%arg0: i32) -> (i32, i32) {
    %c0_i32 = arith.constant 0 : i32
    %c0_i32_0 = arith.constant 0 : i32
    %c0_i32_1 = arith.constant 0 : i32
    return %c0_i32, %c0_i32_0 : i32, i32
  }
  func.func @transform_6(%arg0: i32) -> (i32, i32) {
    %c0_i32 = arith.constant 0 : i32
    %c0_i32_0 = arith.constant 0 : i32
    return %c0_i32, %arg0 : i32, i32
  }
}

</mosaic_0001>

<llo_original>
// kernel: mlp_forward.1
$region0: #{mlp_forward.1}
  #allocation0 [shape = 'u32[]', space=smem, size = 0x4, offset = 0x4, fixed_abs, tag = 'smem constant byte address 0x4 - core index']
  #allocation1 [shape = 'u32[144,128]{1,0:T(1,128)}', space=vmem, size = 0x12000, scoped, tag = 'internal scratch']
  %s0 = inlined_call_operand.vmem [shape: f32[2,512], index: 0, kind: input, shape index: {}]
  %s1 = inlined_call_operand.vmem [shape: f32[32,2], index: 1, kind: input, shape index: {}]
  %s2 = inlined_call_operand.vmem [shape: f32[5,32,1], index: 2, kind: input, shape index: {}]
  %s3 = inlined_call_operand.vmem [shape: bf16[4,32,32], index: 3, kind: input, shape index: {}]
  %s4 = inlined_call_operand.vmem [shape: bf16[8,32], index: 4, kind: input, shape index: {}]
  %s5 = inlined_call_operand.vmem [shape: f32[8,1], index: 5, kind: input, shape index: {}]
  %s6 = inlined_call_operand.vmem [shape: f32[8,512], index: 6, kind: output, shape index: {}]
  %s7 = sld [smem:[#allocation0]]
  $region57: #{mlp_forward.1} parent=0
    _
  %s9 = ssub.s32 1, %s7
  %s10 = scalar_select 0, %s9, %s7
  loop: start=0, step=1, limit=4
  $region2: #{mlp_forward.1} parent=0 // loop_pre_header
    _
  $region3: #{mlp_forward.1} parent=0 // loop_header
    %s12 = sphi 0, %s16
    %p13 = scmp.ge.s32.totalorder %s12, 4
    %s22 = sphi 0, %s24
    %s25 = sphi 0, %s22
    %s26 = sphi 0, %s25
    %s42 = sphi 0, %s26
    %s46 = sphi 0, %s46
    %s48 = sphi 0, %s46
    %s49 = sphi 0, %s48
    %s63 = sphi 0, %s49
    %s67 = sphi 0, %s67
    %s69 = sphi 0, %s67
    %s70 = sphi 0, %s69
    %s84 = sphi 0, %s70
    %s88 = sphi 0, %s88
    %s90 = sphi 0, %s88
    %s91 = sphi 0, %s90
    %s105 = sphi 0, %s91
    %s109 = sphi 0, %s109
    %s111 = sphi 0, %s109
    %s112 = sphi 0, %s111
    %s126 = sphi 0, %s112
    %s130 = sphi 0, %s130
    %s132 = sphi 0, %s130
    %s133 = sphi 0, %s132
    %s147 = sphi 0, %s133
    %s153 = sphi 0, %s155
    %s156 = sphi 0, %s153
    %s157 = sphi 0, %s156
    %s173 = sphi 0, %s157
  $region4: #{mlp_forward.1} parent=0 // loop_header_branch
    %15 = sbr.rel (%p13) target = $region8
  $region5: #{mlp_forward.1} parent=0 // loop_body
    %s17 = ssub.s32 %s12, 1
    %s18 = ssub.s32 %s12, 2
    %s19 = sadd.s32 %s12, 1
    %s20 = ssub.s32 %s12, %s19
    %p21 = scmp.eq.s32.totalorder %s20, 0
    %s23 = sadd.s32 %s22, 1
    %s24 = scalar_select %p21, %s22, %s23
    %p27 = pneg %p21
    %p28 = scmp.eq.s32.totalorder %s12, 1
    %p29 = por %p27, %p28
    %p30 = scmp.ne.s32.totalorder %s22, %s25
    %p31 = scmp.eq.s32.totalorder %s12, 0
    %p32 = por %p30, %p31
    %p33 = scmp.ne.s32.totalorder %s22, %s25
    %p34 = scmp.eq.s32.totalorder %s17, 1
    %p35 = por %p33, %p34
    %p36 = scmp.ne.s32.totalorder %s25, %s26
    %p37 = scmp.eq.s32.totalorder %s17, 0
    %p38 = por %p36, %p37
    %p39 = scmp.ne.s32.totalorder %s25, %s26
    %p40 = scmp.eq.s32.totalorder %s18, 1
    %p41 = por %p39, %p40
    %p43 = scmp.ne.s32.totalorder %s26, %s42
    %p44 = scmp.eq.s32.totalorder %s18, 0
    %p45 = por %p43, %p44
    %s47 = sadd.s32 %s46, 1
    %p50 = scmp.eq.s32.totalorder %s12, 1
    %p51 = scmp.ne.s32.totalorder %s46, %s48
    %p52 = scmp.eq.s32.totalorder %s12, 0
    %p53 = por %p51, %p52
    %p54 = scmp.ne.s32.totalorder %s46, %s48
    %p55 = scmp.eq.s32.totalorder %s17, 1
    %p56 = por %p54, %p55
    %p57 = scmp.ne.s32.totalorder %s48, %s49
    %p58 = scmp.eq.s32.totalorder %s17, 0
    %p59 = por %p57, %p58
    %p60 = scmp.ne.s32.totalorder %s48, %s49
    %p61 = scmp.eq.s32.totalorder %s18, 1
    %p62 = por %p60, %p61
    %p64 = scmp.ne.s32.totalorder %s49, %s63
    %p65 = scmp.eq.s32.totalorder %s18, 0
    %p66 = por %p64, %p65
    %s68 = sadd.s32 %s67, 1
    %p71 = scmp.eq.s32.totalorder %s12, 1
    %p72 = scmp.ne.s32.totalorder %s67, %s69
    %p73 = scmp.eq.s32.totalorder %s12, 0
    %p74 = por %p72, %p73
    %p75 = scmp.ne.s32.totalorder %s67, %s69
    %p76 = scmp.eq.s32.totalorder %s17, 1
    %p77 = por %p75, %p76
    %p78 = scmp.ne.s32.totalorder %s69, %s70
    %p79 = scmp.eq.s32.totalorder %s17, 0
    %p80 = por %p78, %p79
    %p81 = scmp.ne.s32.totalorder %s69, %s70
    %p82 = scmp.eq.s32.totalorder %s18, 1
    %p83 = por %p81, %p82
    %p85 = scmp.ne.s32.totalorder %s70, %s84
    %p86 = scmp.eq.s32.totalorder %s18, 0
    %p87 = por %p85, %p86
    %s89 = sadd.s32 %s88, 1
    %p92 = scmp.eq.s32.totalorder %s12, 1
    %p93 = scmp.ne.s32.totalorder %s88, %s90
    %p94 = scmp.eq.s32.totalorder %s12, 0
    %p95 = por %p93, %p94
    %p96 = scmp.ne.s32.totalorder %s88, %s90
    %p97 = scmp.eq.s32.totalorder %s17, 1
    %p98 = por %p96, %p97
    %p99 = scmp.ne.s32.totalorder %s90, %s91
    %p100 = scmp.eq.s32.totalorder %s17, 0
    %p101 = por %p99, %p100
    %p102 = scmp.ne.s32.totalorder %s90, %s91
    %p103 = scmp.eq.s32.totalorder %s18, 1
    %p104 = por %p102, %p103
    %p106 = scmp.ne.s32.totalorder %s91, %s105
    %p107 = scmp.eq.s32.totalorder %s18, 0
    %p108 = por %p106, %p107
    %s110 = sadd.s32 %s109, 1
    %p113 = scmp.eq.s32.totalorder %s12, 1
    %p114 = scmp.ne.s32.totalorder %s109, %s111
    %p115 = scmp.eq.s32.totalorder %s12, 0
    %p116 = por %p114, %p115
    %p117 = scmp.ne.s32.totalorder %s109, %s111
    %p118 = scmp.eq.s32.totalorder %s17, 1
    %p119 = por %p117, %p118
    %p120 = scmp.ne.s32.totalorder %s111, %s112
    %p121 = scmp.eq.s32.totalorder %s17, 0
    %p122 = por %p120, %p121
    %p123 = scmp.ne.s32.totalorder %s111, %s112
    %p124 = scmp.eq.s32.totalorder %s18, 1
    %p125 = por %p123, %p124
    %p127 = scmp.ne.s32.totalorder %s112, %s126
    %p128 = scmp.eq.s32.totalorder %s18, 0
    %p129 = por %p127, %p128
    %s131 = sadd.s32 %s130, 1
    %p134 = scmp.eq.s32.totalorder %s12, 1
    %p135 = scmp.ne.s32.totalorder %s130, %s132
    %p136 = scmp.eq.s32.totalorder %s12, 0
    %p137 = por %p135, %p136
    %p138 = scmp.ne.s32.totalorder %s130, %s132
    %p139 = scmp.eq.s32.totalorder %s17, 1
    %p140 = por %p138, %p139
    %p141 = scmp.ne.s32.totalorder %s132, %s133
    %p142 = scmp.eq.s32.totalorder %s17, 0
    %p143 = por %p141, %p142
    %p144 = scmp.ne.s32.totalorder %s132, %s133
    %p145 = scmp.eq.s32.totalorder %s18, 1
    %p146 = por %p144, %p145
    %p148 = scmp.ne.s32.totalorder %s133, %s147
    %p149 = scmp.eq.s32.totalorder %s18, 0
    %p150 = por %p148, %p149
    %s151 = ssub.s32 %s12, %s19
    %p152 = scmp.eq.s32.totalorder %s151, 0
    %s154 = sadd.s32 %s153, 1
    %s155 = scalar_select %p152, %s153, %s154
    %p158 = pneg %p152
    %p159 = scmp.eq.s32.totalorder %s12, 1
    %p160 = por %p158, %p159
    %p161 = scmp.ne.s32.totalorder %s153, %s156
    %p162 = scmp.eq.s32.totalorder %s12, 0
    %p163 = por %p161, %p162
    %p164 = scmp.ne.s32.totalorder %s153, %s156
    %p165 = scmp.eq.s32.totalorder %s17, 1
    %p166 = por %p164, %p165
    %p167 = scmp.ne.s32.totalorder %s156, %s157
    %p168 = scmp.eq.s32.totalorder %s17, 0
    %p169 = por %p167, %p168
    %p170 = scmp.ne.s32.totalorder %s156, %s157
    %p171 = scmp.eq.s32.totalorder %s18, 1
    %p172 = por %p170, %p171
    %p174 = scmp.ne.s32.totalorder %s157, %s173
    %p175 = scmp.eq.s32.totalorder %s18, 0
    %p176 = por %p174, %p175
    %p177 = scmp.le.s32.totalorder 1, %s12
    %p178 = scmp.lt.s32.totalorder %s12, 3
    %p179 = pnand %p177, %p178
    %p180 = pneg %p179
    // Predicated region
    $region9: #{mlp_forward.1} parent=5 // pred_check
      _
    $region10: #{mlp_forward.1} parent=5 // pred_check_branch
      %182 = sbr.rel (%p179) target = $region12
    $region11: #{mlp_forward.1} parent=5 // pred_region
      %s183 = ssub.s32 %s12, 1
      // Predicated region
      $region13: #{mlp_forward.1} parent=11 // pred_check
        %p184 = pneg %p59
      $region14: #{mlp_forward.1} parent=11 // pred_check_branch
        %186 = sbr.rel (%p184) target = $region16
      $region15: #{mlp_forward.1} parent=11 // pred_region
        _
      $region16: #{mlp_forward.1} parent=11 // pred_fallthru
        _
      // Predicated region
      $region17: #{mlp_forward.1} parent=11 // pred_check
        %p187 = pneg %p80
      $region18: #{mlp_forward.1} parent=11 // pred_check_branch
        %189 = sbr.rel (%p187) target = $region20
      $region19: #{mlp_forward.1} parent=11 // pred_region
        _
      $region20: #{mlp_forward.1} parent=11 // pred_fallthru
        _
      // Predicated region
      $region21: #{mlp_forward.1} parent=11 // pred_check
        %p190 = pneg %p101
      $region22: #{mlp_forward.1} parent=11 // pred_check_branch
        %192 = sbr.rel (%p190) target = $region24
      $region23: #{mlp_forward.1} parent=11 // pred_region
        _
      $region24: #{mlp_forward.1} parent=11 // pred_fallthru
        _
      // Predicated region
      $region25: #{mlp_forward.1} parent=11 // pred_check
        %p193 = pneg %p122
      $region26: #{mlp_forward.1} parent=11 // pred_check_branch
        %195 = sbr.rel (%p193) target = $region28
      $region27: #{mlp_forward.1} parent=11 // pred_region
        _
      $region28: #{mlp_forward.1} parent=11 // pred_fallthru
        _
      // Predicated region
      $region29: #{mlp_forward.1} parent=11 // pred_check
        %p196 = pneg %p143
      $region30: #{mlp_forward.1} parent=11 // pred_check_branch
        %198 = sbr.rel (%p196) target = $region32
      $region31: #{mlp_forward.1} parent=11 // pred_region
        _
      $region32: #{mlp_forward.1} parent=11 // pred_fallthru
        _
    $region12: #{mlp_forward.1} parent=5 // pred_fallthru
      _
    %p199 = scmp.lt.s32.totalorder %s12, 2
    // Predicated region
    $region33: #{mlp_forward.1} parent=5 // pred_check
      %p200 = pneg %p199
    $region34: #{mlp_forward.1} parent=5 // pred_check_branch
      %202 = sbr.rel (%p200) target = $region36
    $region35: #{mlp_forward.1} parent=5 // pred_region
      // Predicated region
      $region37: #{mlp_forward.1} parent=35 // pred_check
        %p203 = pneg %p32
      $region38: #{mlp_forward.1} parent=35 // pred_check_branch
        %205 = sbr.rel (%p203) target = $region40
      $region39: #{mlp_forward.1} parent=35 // pred_region
        %s206 = smul.u32 2, %s12
        %p207 = scmp.lt.s32.totalorder %s206, 3
        %s208 = scalar_select %p207, %s206, 3
        %s209 = smul.addr %s208, 2
        %s210 = scalar_lea.vmem %s0, %s209
        %s211 = smul.u32 2, %s12
      $region40: #{mlp_forward.1} parent=35 // pred_fallthru
        _
    $region36: #{mlp_forward.1} parent=5 // pred_fallthru
      _
    %p212 = scmp.le.s32.totalorder 1, %s12
    %p213 = scmp.lt.s32.totalorder %s12, 3
    %p214 = pnand %p212, %p213
    %p215 = pneg %p214
    // Predicated region
    $region41: #{mlp_forward.1} parent=5 // pred_check
      _
    $region42: #{mlp_forward.1} parent=5 // pred_check_branch
      %217 = sbr.rel (%p214) target = $region44
    $region43: #{mlp_forward.1} parent=5 // pred_region
      %s218 = ssub.s32 %s12, 1
      %s219 = smul.u32 2, %s17
      %p220 = scmp.lt.s32.totalorder %s219, 3
      %s221 = scalar_select %p220, %s219, 3
      %s222 = smul.addr %s221, 2
      %s223 = scalar_lea.vmem %s0, %s222
      %p224 = pneg %p38
      %p225 = pneg %p35
      %p226 = pneg %p59
      %p227 = pneg %p56
      %p228 = pneg %p80
      %p229 = pneg %p77
      %p230 = pneg %p101
      %p231 = pneg %p98
      %p232 = pneg %p122
      %p233 = pneg %p119
      %p234 = pneg %p143
      %p235 = pneg %p140
      %p236 = pneg %p169
      %p237 = pneg %p166
      %s238 = smul.u32 2, %s17
      %p239 = scmp.lt.s32.totalorder %s238, 3
      %s240 = scalar_select %p239, %s238, 3
      %s241 = smul.addr %s240, 8
      %s242 = scalar_lea.vmem %s6, %s241
      %s243 = smul.u32 2, %s17
      %p244 = scmp.lt.s32.totalorder %s243, 3
      %s245 = scalar_select %p244, %s243, 3
      %s246 = smul.addr %s245, 2
      %s247 = scalar_lea.vmem %s0, %s246
      %s248 = smul.u32 2, %s17
      %s249 = smul.u32 2, %s17
      %p250 = scmp.lt.s32.totalorder %s249, 3
      %s251 = scalar_select %p250, %s249, 3
      %s252 = smul.addr %s251, 8
      %s253 = scalar_lea.vmem %s6, %s252
      %s254 = smul.u32 2, %s17
      %v256 = vld [vmem:[%s247] sm:$0xf]
      %v257 = vld [vmem:[%s1] sm:$0xff]
      %v258 = vld [vmem:[%s1 + $0x8] sm:$0xff]
      %v259 = vld [vmem:[%s1 + $0x10] sm:$0xff]
      %v260 = vld [vmem:[%s1 + $0x18] sm:$0xff]
      %262 = vset.pattern.permute.xlu0 0
      %263 = vperm.xlu0 %262, %v257
      %v264 = vpop.permute.xlu0 %263
      %267 = vset.pattern.permute.xlu0 0
      %268 = vperm.xlu0 %267, %v258
      %v269 = vpop.permute.xlu0 %268
      %272 = vset.pattern.permute.xlu0 0
      %273 = vperm.xlu0 %272, %v259
      %v274 = vpop.permute.xlu0 %273
      %277 = vset.pattern.permute.xlu0 0
      %278 = vperm.xlu0 %277, %v260
      %v279 = vpop.permute.xlu0 %278
      %v282 = vlaneseq
      %v283 = vshrl.u32 %v282, 7
      %v284 = vsub.s32 0, %v283
      %v285 = vrot.slane %v256, %v284
      %v286 = vlaneseq
      %v287 = vshrl.u32 %v286, 7
      %v288 = vsub.s32 2, %v287
      %v289 = vrot.slane %v256, %v288
      %v292 = vlaneseq
      %v293 = vshrl.u32 %v292, 7
      %v294 = vsub.s32 0, %v293
      %v295 = vrot.slane %v285, %v294
      %v296 = vlaneseq
      %v297 = vshrl.u32 %v296, 7
      %v298 = vsub.s32 0, %v297
      %v299 = vrot.slane %v289, %v298
      %v300 = vmul.f32 %v264, %v295
      %v301 = vmul.f32 %v264, %v299
      %v302 = vmul.f32 %v269, %v295
      %v303 = vmul.f32 %v269, %v299
      %v304 = vmul.f32 %v274, %v295
      %v305 = vmul.f32 %v274, %v299
      %v306 = vmul.f32 %v279, %v295
      %v307 = vmul.f32 %v279, %v299
      %308 = vset.pattern.permute.xlu0 1
      %309 = vperm.xlu0 %308, %v257
      %v310 = vpop.permute.xlu0 %309
      %312 = vset.pattern.permute.xlu0 1
      %313 = vperm.xlu0 %312, %v258
      %v314 = vpop.permute.xlu0 %313
      %316 = vset.pattern.permute.xlu0 1
      %317 = vperm.xlu0 %316, %v259
      %v318 = vpop.permute.xlu0 %317
      %320 = vset.pattern.permute.xlu0 1
      %321 = vperm.xlu0 %320, %v260
      %v322 = vpop.permute.xlu0 %321
      %v324 = vlaneseq
      %v325 = vshrl.u32 %v324, 7
      %v326 = vsub.s32 1, %v325
      %v327 = vrot.slane %v256, %v326
      %v328 = vlaneseq
      %v329 = vshrl.u32 %v328, 7
      %v330 = vsub.s32 3, %v329
      %v331 = vrot.slane %v256, %v330
      %v334 = vlaneseq
      %v335 = vshrl.u32 %v334, 7
      %v336 = vsub.s32 1, %v335
      %v337 = vrot.slane %v327, %v336
      %v338 = vlaneseq
      %v339 = vshrl.u32 %v338, 7
      %v340 = vsub.s32 1, %v339
      %v341 = vrot.slane %v331, %v340
      %v342 = vmul.f32 %v310, %v337
      %v343 = vmul.f32 %v310, %v341
      %v344 = vmul.f32 %v314, %v337
      %v345 = vmul.f32 %v314, %v341
      %v346 = vmul.f32 %v318, %v337
      %v347 = vmul.f32 %v318, %v341
      %v348 = vmul.f32 %v322, %v337
      %v349 = vmul.f32 %v322, %v341
      %v350 = vadd.f32 %v300, %v342
      %v351 = vadd.f32 %v301, %v343
      %v352 = vadd.f32 %v302, %v344
      %v353 = vadd.f32 %v303, %v345
      %v354 = vadd.f32 %v304, %v346
      %v355 = vadd.f32 %v305, %v347
      %v356 = vadd.f32 %v306, %v348
      %v357 = vadd.f32 %v307, %v349
      %v358 = vld [vmem:[%s2] sm:$0xff]
      %v359 = vld [vmem:[%s2 + $0x8] sm:$0xff]
      %v360 = vld [vmem:[%s2 + $0x10] sm:$0xff]
      %v361 = vld [vmem:[%s2 + $0x18] sm:$0xff]
      %363 = vset.pattern.permute.xlu0 0
      %364 = vperm.xlu0 %363, %v358
      %v365 = vpop.permute.xlu0 %364
      %368 = vset.pattern.permute.xlu0 0
      %369 = vperm.xlu0 %368, %v359
      %v370 = vpop.permute.xlu0 %369
      %373 = vset.pattern.permute.xlu0 0
      %374 = vperm.xlu0 %373, %v360
      %v375 = vpop.permute.xlu0 %374
      %378 = vset.pattern.permute.xlu0 0
      %379 = vperm.xlu0 %378, %v361
      %v380 = vpop.permute.xlu0 %379
      %v382 = vadd.f32 %v350, %v365
      %v383 = vadd.f32 %v351, %v365
      %v384 = vadd.f32 %v352, %v370
      %v385 = vadd.f32 %v353, %v370
      %v386 = vadd.f32 %v354, %v375
      %v387 = vadd.f32 %v355, %v375
      %v388 = vadd.f32 %v356, %v380
      %v389 = vadd.f32 %v357, %v380
      %v390 = vmax.f32 %v382, 0.0
      %v391 = vmax.f32 %v383, 0.0
      %v392 = vmax.f32 %v384, 0.0
      %v393 = vmax.f32 %v385, 0.0
      %v394 = vmax.f32 %v386, 0.0
      %v395 = vmax.f32 %v387, 0.0
      %v396 = vmax.f32 %v388, 0.0
      %v397 = vmax.f32 %v389, 0.0
      %v398 = vld [vmem:[%s3] sm:$0xf]
      %v399 = vld [vmem:[%s3 + $0x4] sm:$0xf]
      %v400 = vld [vmem:[%s3 + $0x8] sm:$0xf]
      %v401 = vld [vmem:[%s3 + $0xc] sm:$0xf]
      %v402 = vpack.c.bf16 %v392, %v390
      %v403 = vpack.c.bf16 %v393, %v391
      %v404 = vpack.c.bf16 %v396, %v394
      %v405 = vpack.c.bf16 %v397, %v395
      %s406 = scalar_lea.vmem %s2, 32
      %v407 = vld [vmem:[%s406] sm:$0xff]
      %v408 = vld [vmem:[%s406 + $0x8] sm:$0xff]
      %v409 = vld [vmem:[%s406 + $0x10] sm:$0xff]
      %v410 = vld [vmem:[%s406 + $0x18] sm:$0xff]
      %412 = vset.pattern.permute.xlu0 0
      %413 = vperm.xlu0 %412, %v407
      %v414 = vpop.permute.xlu0 %413
      %417 = vset.pattern.permute.xlu0 0
      %418 = vperm.xlu0 %417, %v408
      %v419 = vpop.permute.xlu0 %418
      %422 = vset.pattern.permute.xlu0 0
      %423 = vperm.xlu0 %422, %v409
      %v424 = vpop.permute.xlu0 %423
      %427 = vset.pattern.permute.xlu0 0
      %428 = vperm.xlu0 %427, %v410
      %v429 = vpop.permute.xlu0 %428
      %v435 = vunpack.c.l.b16 %v398
      %v436 = vunpack.c.l.b16 %v399
      %v437 = vunpack.c.l.b16 %v400
      %v438 = vunpack.c.l.b16 %v401
      %v439 = vpack.c.b16 %v436, %v435
      %v440 = vpack.c.b16 %v438, %v437
      %vm441 = vcmask 261120
      %v443 = vsel %vm441, %v439, 0
      %v446 = vsel %vm441, %v440, 0
      %448 = vmatprep.subr.bf16.mxu0 %v403
      %449 = vmatpush1.bf16.msra.mxu0 %v402
      %450 = vmatprep.subr.bf16.mxu0 %v405
      %451 = vmatpush1.bf16.msra.mxu0 %v404
      %452 = vmatprep.subr.bf16.mxu0 0
      %453 = vmatpush1.bf16.msra.mxu0 0
      %454 = vmatprep.subr.bf16.mxu0 0
      %455 = vmatpush1.bf16.msra.mxu0 0
      %456 = vmatprep.subr.bf16.mxu0 0
      %457 = vmatpush1.bf16.msra.mxu0 0
      %458 = vmatprep.subr.bf16.mxu0 0
      %459 = vmatpush1.bf16.msra.mxu0 0
      %460 = vmatprep.subr.bf16.mxu0 0
      %461 = vmatpush1.bf16.msra.mxu0 0
      %462 = vmatprep.subr.bf16.mxu0 0
      %463 = vmatpush1.bf16.msra.mxu0 0
      %464 = vmatprep.subr.bf16.mxu0 0
      %465 = vmatpush1.bf16.msra.mxu0 0
      %466 = vmatprep.subr.bf16.mxu0 0
      %467 = vmatpush1.bf16.msra.mxu0 0
      %468 = vmatprep.subr.bf16.mxu0 0
      %469 = vmatpush1.bf16.msra.mxu0 0
      %470 = vmatprep.subr.bf16.mxu0 0
      %471 = vmatpush1.bf16.msra.mxu0 0
      %472 = vmatprep.subr.bf16.mxu0 0
      %473 = vmatpush1.bf16.msra.mxu0 0
      %474 = vmatprep.subr.bf16.mxu0 0
      %475 = vmatpush1.bf16.msra.mxu0 0
      %476 = vmatprep.subr.bf16.mxu0 0
      %477 = vmatpush1.bf16.msra.mxu0 0
      %478 = vmatprep.subr.bf16.mxu0 0
      %479 = vmatpush1.bf16.msra.mxu0 0
      %480 = vmatprep.mubr.bf16.mxu0 0
      %481 = vmatmul.mubr.bf16.gmra.mrb[0].mxu0 %v443
      %v482 = vpop.f32.mrb[0].mxu0
      %v483 = vadd.f32 %v414, %v482
      %v484 = vpop.f32.mrb[0].mxu0
      %v485 = vadd.f32 %v414, %v484
      %v486 = vpop.f32.mrb[0].mxu0
      %v487 = vadd.f32 %v419, %v486
      %v488 = vpop.f32.mrb[0].mxu0
      %v489 = vadd.f32 %v419, %v488
      %490 = vmatprep.mubr.bf16.mxu0 0
      %491 = vmatmul.mubr.bf16.gmra.mrb[0].mxu0 %v446
      %v492 = vpop.f32.mrb[0].mxu0
      %v493 = vadd.f32 %v424, %v492
      %v494 = vpop.f32.mrb[0].mxu0
      %v495 = vadd.f32 %v424, %v494
      %v496 = vpop.f32.mrb[0].mxu0
      %v497 = vadd.f32 %v429, %v496
      %v498 = vpop.f32.mrb[0].mxu0
      %v499 = vadd.f32 %v429, %v498
      %500 = vdwg.mxu0
      %v501 = vmax.f32 %v483, 0.0
      %v502 = vmax.f32 %v485, 0.0
      %v503 = vmax.f32 %v487, 0.0
      %v504 = vmax.f32 %v489, 0.0
      %v505 = vmax.f32 %v493, 0.0
      %v506 = vmax.f32 %v495, 0.0
      %v507 = vmax.f32 %v497, 0.0
      %v508 = vmax.f32 %v499, 0.0
      %s509 = scalar_lea.vmem %s3, 16
      %v510 = vld [vmem:[%s509] sm:$0xf]
      %v511 = vld [vmem:[%s509 + $0x4] sm:$0xf]
      %v512 = vld [vmem:[%s509 + $0x8] sm:$0xf]
      %v513 = vld [vmem:[%s509 + $0xc] sm:$0xf]
      %v514 = vpack.c.bf16 %v503, %v501
      %v515 = vpack.c.bf16 %v504, %v502
      %v516 = vpack.c.bf16 %v507, %v505
      %v517 = vpack.c.bf16 %v508, %v506
      %s518 = scalar_lea.vmem %s2, 64
      %v519 = vld [vmem:[%s518] sm:$0xff]
      %v520 = vld [vmem:[%s518 + $0x8] sm:$0xff]
      %v521 = vld [vmem:[%s518 + $0x10] sm:$0xff]
      %v522 = vld [vmem:[%s518 + $0x18] sm:$0xff]
      %524 = vset.pattern.permute.xlu0 0
      %525 = vperm.xlu0 %524, %v519
      %v526 = vpop.permute.xlu0 %525
      %529 = vset.pattern.permute.xlu0 0
      %530 = vperm.xlu0 %529, %v520
      %v531 = vpop.permute.xlu0 %530
      %534 = vset.pattern.permute.xlu0 0
      %535 = vperm.xlu0 %534, %v521
      %v536 = vpop.permute.xlu0 %535
      %539 = vset.pattern.permute.xlu0 0
      %540 = vperm.xlu0 %539, %v522
      %v541 = vpop.permute.xlu0 %540
      %v547 = vunpack.c.l.b16 %v510
      %v548 = vunpack.c.l.b16 %v511
      %v549 = vunpack.c.l.b16 %v512
      %v550 = vunpack.c.l.b16 %v513
      %v551 = vpack.c.b16 %v548, %v547
      %v552 = vpack.c.b16 %v550, %v549
      %v554 = vsel %vm441, %v551, 0
      %v557 = vsel %vm441, %v552, 0
      %559 = vmatprep.subr.bf16.mxu0 %v515
      %560 = vmatpush1.bf16.msra.mxu0 %v514
      %561 = vmatprep.subr.bf16.mxu0 %v517
      %562 = vmatpush1.bf16.msra.mxu0 %v516
      %563 = vmatprep.subr.bf16.mxu0 0
      %564 = vmatpush1.bf16.msra.mxu0 0
      %565 = vmatprep.subr.bf16.mxu0 0
      %566 = vmatpush1.bf16.msra.mxu0 0
      %567 = vmatprep.subr.bf16.mxu0 0
      %568 = vmatpush1.bf16.msra.mxu0 0
      %569 = vmatprep.subr.bf16.mxu0 0
      %570 = vmatpush1.bf16.msra.mxu0 0
      %571 = vmatprep.subr.bf16.mxu0 0
      %572 = vmatpush1.bf16.msra.mxu0 0
      %573 = vmatprep.subr.bf16.mxu0 0
      %574 = vmatpush1.bf16.msra.mxu0 0
      %575 = vmatprep.subr.bf16.mxu0 0
      %576 = vmatpush1.bf16.msra.mxu0 0
      %577 = vmatprep.subr.bf16.mxu0 0
      %578 = vmatpush1.bf16.msra.mxu0 0
      %579 = vmatprep.subr.bf16.mxu0 0
      %580 = vmatpush1.bf16.msra.mxu0 0
      %581 = vmatprep.subr.bf16.mxu0 0
      %582 = vmatpush1.bf16.msra.mxu0 0
      %583 = vmatprep.subr.bf16.mxu0 0
      %584 = vmatpush1.bf16.msra.mxu0 0
      %585 = vmatprep.subr.bf16.mxu0 0
      %586 = vmatpush1.bf16.msra.mxu0 0
      %587 = vmatprep.subr.bf16.mxu0 0
      %588 = vmatpush1.bf16.msra.mxu0 0
      %589 = vmatprep.subr.bf16.mxu0 0
      %590 = vmatpush1.bf16.msra.mxu0 0
      %591 = vmatprep.mubr.bf16.mxu0 0
      %592 = vmatmul.mubr.bf16.gmra.mrb[0].mxu0 %v554
      %v593 = vpop.f32.mrb[0].mxu0
      %v594 = vadd.f32 %v526, %v593
      %v595 = vpop.f32.mrb[0].mxu0
      %v596 = vadd.f32 %v526, %v595
      %v597 = vpop.f32.mrb[0].mxu0
      %v598 = vadd.f32 %v531, %v597
      %v599 = vpop.f32.mrb[0].mxu0
      %v600 = vadd.f32 %v531, %v599
      %601 = vmatprep.mubr.bf16.mxu0 0
      %602 = vmatmul.mubr.bf16.gmra.mrb[0].mxu0 %v557
      %v603 = vpop.f32.mrb[0].mxu0
      %v604 = vadd.f32 %v536, %v603
      %v605 = vpop.f32.mrb[0].mxu0
      %v606 = vadd.f32 %v536, %v605
      %v607 = vpop.f32.mrb[0].mxu0
      %v608 = vadd.f32 %v541, %v607
      %v609 = vpop.f32.mrb[0].mxu0
      %v610 = vadd.f32 %v541, %v609
      %611 = vdwg.mxu0
      %v612 = vmax.f32 %v594, 0.0
      %v613 = vmax.f32 %v596, 0.0
      %v614 = vmax.f32 %v598, 0.0
      %v615 = vmax.f32 %v600, 0.0
      %v616 = vmax.f32 %v604, 0.0
      %v617 = vmax.f32 %v606, 0.0
      %v618 = vmax.f32 %v608, 0.0
      %v619 = vmax.f32 %v610, 0.0
      %s620 = scalar_lea.vmem %s3, 32
      %v621 = vld [vmem:[%s620] sm:$0xf]
      %v622 = vld [vmem:[%s620 + $0x4] sm:$0xf]
      %v623 = vld [vmem:[%s620 + $0x8] sm:$0xf]
      %v624 = vld [vmem:[%s620 + $0xc] sm:$0xf]
      %v625 = vpack.c.bf16 %v614, %v612
      %v626 = vpack.c.bf16 %v615, %v613
      %v627 = vpack.c.bf16 %v618, %v616
      %v628 = vpack.c.bf16 %v619, %v617
      %s629 = scalar_lea.vmem %s2, 96
      %v630 = vld [vmem:[%s629] sm:$0xff]
      %v631 = vld [vmem:[%s629 + $0x8] sm:$0xff]
      %v632 = vld [vmem:[%s629 + $0x10] sm:$0xff]
      %v633 = vld [vmem:[%s629 + $0x18] sm:$0xff]
      %635 = vset.pattern.permute.xlu0 0
      %636 = vperm.xlu0 %635, %v630
      %v637 = vpop.permute.xlu0 %636
      %640 = vset.pattern.permute.xlu0 0
      %641 = vperm.xlu0 %640, %v631
      %v642 = vpop.permute.xlu0 %641
      %645 = vset.pattern.permute.xlu0 0
      %646 = vperm.xlu0 %645, %v632
      %v647 = vpop.permute.xlu0 %646
      %650 = vset.pattern.permute.xlu0 0
      %651 = vperm.xlu0 %650, %v633
      %v652 = vpop.permute.xlu0 %651
      %v658 = vunpack.c.l.b16 %v621
      %v659 = vunpack.c.l.b16 %v622
      %v660 = vunpack.c.l.b16 %v623
      %v661 = vunpack.c.l.b16 %v624
      %v662 = vpack.c.b16 %v659, %v658
      %v663 = vpack.c.b16 %v661, %v660
      %v665 = vsel %vm441, %v662, 0
      %v668 = vsel %vm441, %v663, 0
      %670 = vmatprep.subr.bf16.mxu0 %v626
      %671 = vmatpush1.bf16.msra.mxu0 %v625
      %672 = vmatprep.subr.bf16.mxu0 %v628
      %673 = vmatpush1.bf16.msra.mxu0 %v627
      %674 = vmatprep.subr.bf16.mxu0 0
      %675 = vmatpush1.bf16.msra.mxu0 0
      %676 = vmatprep.subr.bf16.mxu0 0
      %677 = vmatpush1.bf16.msra.mxu0 0
      %678 = vmatprep.subr.bf16.mxu0 0
      %679 = vmatpush1.bf16.msra.mxu0 0
      %680 = vmatprep.subr.bf16.mxu0 0
      %681 = vmatpush1.bf16.msra.mxu0 0
      %682 = vmatprep.subr.bf16.mxu0 0
      %683 = vmatpush1.bf16.msra.mxu0 0
      %684 = vmatprep.subr.bf16.mxu0 0
      %685 = vmatpush1.bf16.msra.mxu0 0
      %686 = vmatprep.subr.bf16.mxu0 0
      %687 = vmatpush1.bf16.msra.mxu0 0
      %688 = vmatprep.subr.bf16.mxu0 0
      %689 = vmatpush1.bf16.msra.mxu0 0
      %690 = vmatprep.subr.bf16.mxu0 0
      %691 = vmatpush1.bf16.msra.mxu0 0
      %692 = vmatprep.subr.bf16.mxu0 0
      %693 = vmatpush1.bf16.msra.mxu0 0
      %694 = vmatprep.subr.bf16.mxu0 0
      %695 = vmatpush1.bf16.msra.mxu0 0
      %696 = vmatprep.subr.bf16.mxu0 0
      %697 = vmatpush1.bf16.msra.mxu0 0
      %698 = vmatprep.subr.bf16.mxu0 0
      %699 = vmatpush1.bf16.msra.mxu0 0
      %700 = vmatprep.subr.bf16.mxu0 0
      %701 = vmatpush1.bf16.msra.mxu0 0
      %702 = vmatprep.mubr.bf16.mxu0 0
      %703 = vmatmul.mubr.bf16.gmra.mrb[0].mxu0 %v665
      %v704 = vpop.f32.mrb[0].mxu0
      %v705 = vadd.f32 %v637, %v704
      %v706 = vpop.f32.mrb[0].mxu0
      %v707 = vadd.f32 %v637, %v706
      %v708 = vpop.f32.mrb[0].mxu0
      %v709 = vadd.f32 %v642, %v708
      %v710 = vpop.f32.mrb[0].mxu0
      %v711 = vadd.f32 %v642, %v710
      %712 = vmatprep.mubr.bf16.mxu0 0
      %713 = vmatmul.mubr.bf16.gmra.mrb[0].mxu0 %v668
      %v714 = vpop.f32.mrb[0].mxu0
      %v715 = vadd.f32 %v647, %v714
      %v716 = vpop.f32.mrb[0].mxu0
      %v717 = vadd.f32 %v647, %v716
      %v718 = vpop.f32.mrb[0].mxu0
      %v719 = vadd.f32 %v652, %v718
      %v720 = vpop.f32.mrb[0].mxu0
      %v721 = vadd.f32 %v652, %v720
      %722 = vdwg.mxu0
      %v723 = vmax.f32 %v705, 0.0
      %v724 = vmax.f32 %v707, 0.0
      %v725 = vmax.f32 %v709, 0.0
      %v726 = vmax.f32 %v711, 0.0
      %v727 = vmax.f32 %v715, 0.0
      %v728 = vmax.f32 %v717, 0.0
      %v729 = vmax.f32 %v719, 0.0
      %v730 = vmax.f32 %v721, 0.0
      %s731 = scalar_lea.vmem %s3, 48
      %v732 = vld [vmem:[%s731] sm:$0xf]
      %v733 = vld [vmem:[%s731 + $0x4] sm:$0xf]
      %v734 = vld [vmem:[%s731 + $0x8] sm:$0xf]
      %v735 = vld [vmem:[%s731 + $0xc] sm:$0xf]
      %v736 = vpack.c.bf16 %v725, %v723
      %v737 = vpack.c.bf16 %v726, %v724
      %v738 = vpack.c.bf16 %v729, %v727
      %v739 = vpack.c.bf16 %v730, %v728
      %s740 = scalar_lea.vmem %s2, 128
      %v741 = vld [vmem:[%s740] sm:$0xff]
      %v742 = vld [vmem:[%s740 + $0x8] sm:$0xff]
      %v743 = vld [vmem:[%s740 + $0x10] sm:$0xff]
      %v744 = vld [vmem:[%s740 + $0x18] sm:$0xff]
      %746 = vset.pattern.permute.xlu0 0
      %747 = vperm.xlu0 %746, %v741
      %v748 = vpop.permute.xlu0 %747
      %751 = vset.pattern.permute.xlu0 0
      %752 = vperm.xlu0 %751, %v742
      %v753 = vpop.permute.xlu0 %752
      %756 = vset.pattern.permute.xlu0 0
      %757 = vperm.xlu0 %756, %v743
      %v758 = vpop.permute.xlu0 %757
      %761 = vset.pattern.permute.xlu0 0
      %762 = vperm.xlu0 %761, %v744
      %v763 = vpop.permute.xlu0 %762
      %v769 = vunpack.c.l.b16 %v732
      %v770 = vunpack.c.l.b16 %v733
      %v771 = vunpack.c.l.b16 %v734
      %v772 = vunpack.c.l.b16 %v735
      %v773 = vpack.c.b16 %v770, %v769
      %v774 = vpack.c.b16 %v772, %v771
      %v776 = vsel %vm441, %v773, 0
      %v779 = vsel %vm441, %v774, 0
      %781 = vmatprep.subr.bf16.mxu0 %v737
      %782 = vmatpush1.bf16.msra.mxu0 %v736
      %783 = vmatprep.subr.bf16.mxu0 %v739
      %784 = vmatpush1.bf16.msra.mxu0 %v738
      %785 = vmatprep.subr.bf16.mxu0 0
      %786 = vmatpush1.bf16.msra.mxu0 0
      %787 = vmatprep.subr.bf16.mxu0 0
      %788 = vmatpush1.bf16.msra.mxu0 0
      %789 = vmatprep.subr.bf16.mxu0 0
      %790 = vmatpush1.bf16.msra.mxu0 0
      %791 = vmatprep.subr.bf16.mxu0 0
      %792 = vmatpush1.bf16.msra.mxu0 0
      %793 = vmatprep.subr.bf16.mxu0 0
      %794 = vmatpush1.bf16.msra.mxu0 0
      %795 = vmatprep.subr.bf16.mxu0 0
      %796 = vmatpush1.bf16.msra.mxu0 0
      %797 = vmatprep.subr.bf16.mxu0 0
      %798 = vmatpush1.bf16.msra.mxu0 0
      %799 = vmatprep.subr.bf16.mxu0 0
      %800 = vmatpush1.bf16.msra.mxu0 0
      %801 = vmatprep.subr.bf16.mxu0 0
      %802 = vmatpush1.bf16.msra.mxu0 0
      %803 = vmatprep.subr.bf16.mxu0 0
      %804 = vmatpush1.bf16.msra.mxu0 0
      %805 = vmatprep.subr.bf16.mxu0 0
      %806 = vmatpush1.bf16.msra.mxu0 0
      %807 = vmatprep.subr.bf16.mxu0 0
      %808 = vmatpush1.bf16.msra.mxu0 0
      %809 = vmatprep.subr.bf16.mxu0 0
      %810 = vmatpush1.bf16.msra.mxu0 0
      %811 = vmatprep.subr.bf16.mxu0 0
      %812 = vmatpush1.bf16.msra.mxu0 0
      %813 = vmatprep.mubr.bf16.mxu0 0
      %814 = vmatmul.mubr.bf16.gmra.mrb[0].mxu0 %v776
      %v815 = vpop.f32.mrb[0].mxu0
      %v816 = vadd.f32 %v748, %v815
      %v817 = vpop.f32.mrb[0].mxu0
      %v818 = vadd.f32 %v748, %v817
      %v819 = vpop.f32.mrb[0].mxu0
      %v820 = vadd.f32 %v753, %v819
      %v821 = vpop.f32.mrb[0].mxu0
      %v822 = vadd.f32 %v753, %v821
      %823 = vmatprep.mubr.bf16.mxu0 0
      %824 = vmatmul.mubr.bf16.gmra.mrb[0].mxu0 %v779
      %v825 = vpop.f32.mrb[0].mxu0
      %v826 = vadd.f32 %v758, %v825
      %v827 = vpop.f32.mrb[0].mxu0
      %v828 = vadd.f32 %v758, %v827
      %v829 = vpop.f32.mrb[0].mxu0
      %v830 = vadd.f32 %v763, %v829
      %v831 = vpop.f32.mrb[0].mxu0
      %v832 = vadd.f32 %v763, %v831
      %833 = vdwg.mxu0
      %v834 = vmax.f32 %v816, 0.0
      %v835 = vmax.f32 %v818, 0.0
      %v836 = vmax.f32 %v820, 0.0
      %v837 = vmax.f32 %v822, 0.0
      %v838 = vmax.f32 %v826, 0.0
      %v839 = vmax.f32 %v828, 0.0
      %v840 = vmax.f32 %v830, 0.0
      %v841 = vmax.f32 %v832, 0.0
      %v842 = vld [vmem:[%s4] sm:$0xf]
      %v843 = vpack.c.bf16 %v836, %v834
      %v844 = vpack.c.bf16 %v837, %v835
      %v845 = vpack.c.bf16 %v840, %v838
      %v846 = vpack.c.bf16 %v841, %v839
      %v847 = vld [vmem:[%s5] sm:$0xff]
      %849 = vset.pattern.permute.xlu0 0
      %850 = vperm.xlu0 %849, %v847
      %v851 = vpop.permute.xlu0 %850
      %v854 = vsel %vm441, %v842, 0
      %856 = vmatprep.subr.bf16.mxu0 %v844
      %857 = vmatpush1.bf16.msra.mxu0 %v843
      %858 = vmatprep.subr.bf16.mxu0 %v846
      %859 = vmatpush1.bf16.msra.mxu0 %v845
      %860 = vmatprep.subr.bf16.mxu0 0
      %861 = vmatpush1.bf16.msra.mxu0 0
      %862 = vmatprep.subr.bf16.mxu0 0
      %863 = vmatpush1.bf16.msra.mxu0 0
      %864 = vmatprep.subr.bf16.mxu0 0
      %865 = vmatpush1.bf16.msra.mxu0 0
      %866 = vmatprep.subr.bf16.mxu0 0
      %867 = vmatpush1.bf16.msra.mxu0 0
      %868 = vmatprep.subr.bf16.mxu0 0
      %869 = vmatpush1.bf16.msra.mxu0 0
      %870 = vmatprep.subr.bf16.mxu0 0
      %871 = vmatpush1.bf16.msra.mxu0 0
      %872 = vmatprep.subr.bf16.mxu0 0
      %873 = vmatpush1.bf16.msra.mxu0 0
      %874 = vmatprep.subr.bf16.mxu0 0
      %875 = vmatpush1.bf16.msra.mxu0 0
      %876 = vmatprep.subr.bf16.mxu0 0
      %877 = vmatpush1.bf16.msra.mxu0 0
      %878 = vmatprep.subr.bf16.mxu0 0
      %879 = vmatpush1.bf16.msra.mxu0 0
      %880 = vmatprep.subr.bf16.mxu0 0
      %881 = vmatpush1.bf16.msra.mxu0 0
      %882 = vmatprep.subr.bf16.mxu0 0
      %883 = vmatpush1.bf16.msra.mxu0 0
      %884 = vmatprep.subr.bf16.mxu0 0
      %885 = vmatpush1.bf16.msra.mxu0 0
      %886 = vmatprep.subr.bf16.mxu0 0
      %887 = vmatpush1.bf16.msra.mxu0 0
      %888 = vmatprep.mubr.bf16.mxu0 0
      %889 = vmatmul.mubr.bf16.gmra.mrb[0].mxu0 %v854
      %v890 = vpop.f32.mrb[0].mxu0
      %v891 = vadd.f32 %v851, %v890
      %v892 = vpop.f32.mrb[0].mxu0
      %v893 = vadd.f32 %v851, %v892
      %v894 = vpop.f32.mrb[0].mxu0
      %v895 = vpop.f32.mrb[0].mxu0
      %896 = vdwg.mxu0
      %897 = vst [vmem:[%s253] sm:$0xff] %v891
      %898 = vst [vmem:[%s253 + $0x8] sm:$0xff] %v893
      %s899 = smul.u32 2, %s17
      %p900 = scmp.lt.s32.totalorder %s899, 3
      %s901 = scalar_select %p900, %s899, 3
      %s902 = smul.addr %s901, 8
      %s903 = scalar_lea.vmem %s6, %s902
      // Predicated region
      $region45: #{mlp_forward.1} parent=43 // pred_check
        %p904 = pneg %p166
      $region46: #{mlp_forward.1} parent=43 // pred_check_branch
        %906 = sbr.rel (%p904) target = $region48
      $region47: #{mlp_forward.1} parent=43 // pred_region
        %s907 = smul.u32 2, %s17
      $region48: #{mlp_forward.1} parent=43 // pred_fallthru
        _
    $region44: #{mlp_forward.1} parent=5 // pred_fallthru
      _
    %p908 = scmp.le.s32.totalorder 2, %s12
    // Predicated region
    $region49: #{mlp_forward.1} parent=5 // pred_check
      %p909 = pneg %p908
    $region50: #{mlp_forward.1} parent=5 // pred_check_branch
      %911 = sbr.rel (%p909) target = $region52
    $region51: #{mlp_forward.1} parent=5 // pred_region
      %s912 = ssub.s32 %s12, 2
      // Predicated region
      $region53: #{mlp_forward.1} parent=51 // pred_check
        %p913 = pneg %p172
      $region54: #{mlp_forward.1} parent=51 // pred_check_branch
        %915 = sbr.rel (%p913) target = $region56
      $region55: #{mlp_forward.1} parent=51 // pred_region
        %s916 = smul.u32 2, %s18
        %p917 = scmp.lt.s32.totalorder %s916, 3
        %s918 = scalar_select %p917, %s916, 3
        %s919 = smul.addr %s918, 8
        %s920 = scalar_lea.vmem %s6, %s919
      $region56: #{mlp_forward.1} parent=51 // pred_fallthru
        _
    $region52: #{mlp_forward.1} parent=5 // pred_fallthru
      _
  $region6: #{mlp_forward.1} parent=0 // loop_footer
    %s16 = sadd.s32 1, %s12
  $region7: #{mlp_forward.1} parent=0 // loop_footer_branch
    %11 = sbr.rel target = $region3
  $region8: #{mlp_forward.1} parent=0 // loop_exit
    _

</llo_original>
